<compile_context>
chip_gen: v6e
topology: v6e:2x2x1
jax: 0.10.0
libtpu: 0.0.40
codegen_flags: <defaults>
</compile_context>

<pallas_src>
import functools

import numpy as np
import jax
import jax.numpy as jnp
from jax import lax
from jax.experimental import pallas as pl
from jax.experimental.pallas import tpu as pltpu

_LANES = 128
_SUBLANES = 8


def _round_up(x, m):
    return ((x + m - 1) // m) * m


@functools.lru_cache(maxsize=None)
def _default_block_rows():
    """Generation-aware default tile height (rows of 128 lanes)."""
    try:
        kind = jax.devices()[0].device_kind.lower()
    except Exception:  # pragma: no cover - defensive
        return 2048
    if "7" in kind:
        # v7x: 2 TCs @ ~3.2 TB/s -> bigger tiles to amortize per-step overhead.
        # VMEM (fused 2-pair, f32): 4 inputs x 2 bufs x 2 MiB = 16 MiB < 32 MiB scoped.
        return 4096
    # v6e (~1.4 TB/s) and v5e (16 MiB scoped VMEM default): 2048 keeps the
    # double-buffered working set at ~8 MiB while overhead stays <10%.
    return 2048


# ---------------------------------------------------------------------------
# Pallas kernel: fused photometric sum-of-squared-differences reduction
# ---------------------------------------------------------------------------
def _photo_sq_sum_kernel(*refs, num_pairs, n_rows, steps_per_core, block_rows,
                         needs_mask):
    """Accumulates sum((x_p - y_p)^2) over all pairs p and all grid steps.

    refs = (x_0, y_0, ..., x_{P-1}, y_{P-1}, out, acc)
      * inputs: (block_rows, 128) tiles in their native dtype (upcast in-kernel)
      * out:    (1, 1, 1) f32 per-core partial, written only on the last i step
      * acc:    (8, 128) f32 VMEM scratch (per-core) elementwise accumulator
    Grid: (cores, steps) = ("parallel", "arbitrary").
    """
    in_refs = refs[: 2 * num_pairs]
    out_ref = refs[2 * num_pairs]
    acc_ref = refs[2 * num_pairs + 1]
    c = pl.program_id(0)           # core ("parallel") axis
    i = pl.program_id(1)           # reduction ("arbitrary") axis

    @pl.when(i == 0)
    def _():
        acc_ref[...] = jnp.zeros_like(acc_ref)

    def tile_partial(masked):
        """(8, 128) f32 partial sum for this tile. Pure VALU vreg adds."""
        if masked:
            row = row0 + lax.broadcasted_iota(
                jnp.int32, (block_rows, _LANES), 0)
            valid = row < n_rows
        part = jnp.zeros((_SUBLANES, _LANES), jnp.float32)
        for p in range(num_pairs):
            x = in_refs[2 * p][...].astype(jnp.float32)
            y = in_refs[2 * p + 1][...].astype(jnp.float32)
            d = x - y
            sq = d * d
            if masked:
                sq = jnp.where(valid, sq, 0.0)
            # (br,128) -> (br//8, 8, 128) is sublane-batched; sum over the
            # leading axis is vreg-vs-vreg adds, no cross-lane movement.
            part = part + jnp.sum(sq.reshape(-1, _SUBLANES, _LANES), axis=0)
        return part

    if needs_mask:
        # UNclamped global row offset of this tile (the index_map clamps phantom
        # trailing blocks onto the last real block; those land here fully masked).
        row0 = (c * steps_per_core + i) * block_rows

        @pl.when(row0 + block_rows <= n_rows)      # common case: full tile
        def _():
            acc_ref[...] += tile_partial(False)

        @pl.when(row0 + block_rows > n_rows)       # boundary / phantom tile
        def _():
            acc_ref[...] += tile_partial(True)
    else:
        acc_ref[...] += tile_partial(False)

    @pl.when(i == pl.num_programs(1) - 1)
    def _():
        out_ref[...] = jnp.sum(acc_ref[...]).reshape(1, 1, 1)


def _split_lane_slab(x):
    """Flat view split into a (rows, 128) lane-dense slab plus a <128-elem tail."""
    flat = x.reshape(-1)                 # contiguous reshape: no HBM copy
    n = flat.shape[0]
    main = (n // _LANES) * _LANES
    slab = flat[:main].reshape(-1, _LANES) if main else None
    tail = flat[main:] if main < n else None
    return slab, tail


def _photo_sq_sum(pairs, block_rows=None):
    """Single pallas_call computing sum over all (x, y) pairs of sum((x-y)^2)."""
    if block_rows is None:
        block_rows = _default_block_rows()

    slabs = []
    tail_sum = jnp.float32(0.0)
    rows = None
    for x, y in pairs:
        xs, xt = _split_lane_slab(x)
        ys, yt = _split_lane_slab(y)
        if xt is not None:
            # TODO(synk): the <128-element remainder is summed JAX-side (avoids a
            # full jnp.pad HBM copy); the main-prefix slice may still copy when
            # n % 128 != 0, but typical image sizes take the copy-free branch.
            tail_sum = tail_sum + jnp.sum(
                (xt.astype(jnp.float32) - yt.astype(jnp.float32)) ** 2)
        if xs is not None:
            assert rows is None or rows == xs.shape[0], \
                "fused photometric pairs must have equal sizes"
            rows = xs.shape[0]
            slabs += [xs, ys]

    if not slabs:          # everything fit in the tail (fewer than 128 elements)
        return tail_sum

    num_pairs = len(slabs) // 2

    # Big tiles amortize the ~0.35us/step pipeline overhead; clamp for tiny inputs.
    br = min(_round_up(block_rows, _SUBLANES), _round_up(rows, _SUBLANES))
    total_blocks = pl.cdiv(rows, br)
    # Leading "parallel" axis shards the HBM-bound reduction across both
    # TensorCores on multi-TC chips (v7x); near-neutral when there is one TC.
    num_cores = 2 if total_blocks >= 2 else 1
    spc = pl.cdiv(total_blocks, num_cores)          # grid steps per core
    covered = num_cores * spc * br
    needs_mask = covered != rows
    max_blk = total_blocks - 1

    def in_map(c, i):
        # Clamp phantom trailing blocks (odd total_blocks under the 2-way split)
        # onto the last real block; the kernel masks them to exactly zero.
        return (jnp.minimum(c * spc + i, max_blk), 0)

    kernel = functools.partial(
        _photo_sq_sum_kernel,
        num_pairs=num_pairs,
        n_rows=rows,
        steps_per_core=spc,
        block_rows=br,
        needs_mask=needs_mask,
    )

    elems = rows * _LANES * num_pairs
    bytes_accessed = sum(int(np.prod(s.shape)) * s.dtype.itemsize for s in slabs)
    cost = pl.CostEstimate(flops=3 * elems + rows * _LANES,
                           transcendentals=0,
                           bytes_accessed=bytes_accessed + num_cores * 4)

    partials = pl.pallas_call(
        kernel,
        out_shape=jax.ShapeDtypeStruct((num_cores, 1, 1), jnp.float32),
        grid=(num_cores, spc),
        in_specs=[pl.BlockSpec((br, _LANES), in_map) for _ in slabs],
        out_specs=pl.BlockSpec((1, 1, 1), lambda c, i: (c, 0, 0)),
        scratch_shapes=[pltpu.VMEM((_SUBLANES, _LANES), jnp.float32)],
        compiler_params=pltpu.CompilerParams(
            dimension_semantics=("parallel", "arbitrary")),
        cost_estimate=cost,
    )(*slabs)
    return jnp.sum(partials) + tail_sum


def photometric_mse(x, y, block_rows=None):
    """img2mse: mean((x - y)^2)."""
    n = int(np.prod(x.shape))
    return _photo_sq_sum([(x, y)], block_rows) / jnp.float32(n)


def photometric_mse_pair(xa, ya, xb, yb, block_rows=None):
    """mean((xa-ya)^2) + mean((xb-yb)^2); fused into ONE pallas_call when sizes match."""
    na = int(np.prod(xa.shape))
    nb = int(np.prod(xb.shape))
    if na == nb:
        return _photo_sq_sum([(xa, ya), (xb, yb)], block_rows) / jnp.float32(na)
    return photometric_mse(xa, ya, block_rows) + photometric_mse(xb, yb, block_rows)


# ---------------------------------------------------------------------------
# Uncertainty-weighted VO L1 loss (plain JAX: ~20 flops on (N, 6), lane-sparse)
# ---------------------------------------------------------------------------
def vo_loss(pred, targ, srx, srq):
    pred = pred.reshape(-1, 6).astype(jnp.float32)
    targ = targ.reshape(-1, 6).astype(jnp.float32)
    d = jnp.abs(pred - targ)
    t_l1 = jnp.mean(d[:, :3])
    q_l1 = jnp.mean(d[:, 3:])
    return jnp.exp(-srx) * t_l1 + srx + jnp.exp(-srq) * q_l1 + srq


# ---------------------------------------------------------------------------
# pose -> logq entirely on device (batched closed-form mat2quat, no eigh)
# ---------------------------------------------------------------------------
def _mat2quat(R):
    """Closed-form (branchless Shepperd) mat2quat, batched.

    R: (B, 3, 3) -> (B, 4) wxyz. For proper rotation matrices this matches the
    transforms3d Bar-Itzhack eig result (up to fp error), without dispatching an
    iterative XLA eigensolver every criterion call.
    """
    R = R.astype(jnp.float32)
    m00, m01, m02 = R[..., 0, 0], R[..., 0, 1], R[..., 0, 2]
    m10, m11, m12 = R[..., 1, 0], R[..., 1, 1], R[..., 1, 2]
    m20, m21, m22 = R[..., 2, 0], R[..., 2, 1], R[..., 2, 2]

    tw = 1.0 + m00 + m11 + m22        # = 4w^2
    tx = 1.0 + m00 - m11 - m22        # = 4x^2
    ty = 1.0 - m00 + m11 - m22        # = 4y^2
    tz = 1.0 - m00 - m11 + m22        # = 4z^2

    # Unnormalized candidates, each proportional to (w, x, y, z):
    cand_w = jnp.stack([tw, m21 - m12, m02 - m20, m10 - m01], axis=-1)   # 4w*q
    cand_x = jnp.stack([m21 - m12, tx, m01 + m10, m02 + m20], axis=-1)   # 4x*q
    cand_y = jnp.stack([m02 - m20, m01 + m10, ty, m12 + m21], axis=-1)   # 4y*q
    cand_z = jnp.stack([m10 - m01, m02 + m20, m12 + m21, tz], axis=-1)   # 4z*q

    cands = jnp.stack([cand_w, cand_x, cand_y, cand_z], axis=-2)         # (B,4,4)
    mags = jnp.stack([tw, tx, ty, tz], axis=-1)                          # (B,4)
    idx = jnp.argmax(mags, axis=-1)
    q = jnp.take_along_axis(cands, idx[..., None, None], axis=-2)[..., 0, :]
    q = q / jnp.linalg.norm(q, axis=-1, keepdims=True)
    q = jnp.where(q[..., :1] < 0.0, -q, q)
    return q


def _qlog_np_style(q):
    """numpy-style qlog from process_poses: zeros when the vector part is exactly zero."""
    n = jnp.linalg.norm(q[:, 1:], axis=1, keepdims=True)
    # TODO(synk): original np.arccos has no clip; clip only guards fp overshoot past 1.
    logq = jnp.arccos(jnp.clip(q[:, :1], -1.0, 1.0)) * q[:, 1:] / jnp.maximum(n, 1e-12)
    return jnp.where(n == 0.0, jnp.zeros_like(logq), logq)


def pose2logq(poses):
    """(B, 3, 4) [R|t] -> (B, 6) [t, logq]; identity alignment, zero mean, unit std."""
    p = jnp.asarray(poses, jnp.float32).reshape(-1, 12)
    t = p[:, 3::4]                                 # columns 3, 7, 11
    R = p.reshape(-1, 3, 4)[:, :, :3]
    q = _mat2quat(R)
    q = q * jnp.sign(q[:, :1])                     # parity with np.sign(0) == 0
    return jnp.concatenate([t, _qlog_np_style(q)], axis=1)


# ---------------------------------------------------------------------------
# Quaternion / VO algebra (plain JAX glue on (1, d) vectors)
# ---------------------------------------------------------------------------
def _normalize(x, axis):
    return x / jnp.linalg.norm(x, axis=axis, keepdims=True)


def _qmult(q1, q2):
    q1s, q1v = q1[:, :1], q1[:, 1:]
    q2s, q2v = q2[:, :1], q2[:, 1:]
    qs = q1s * q2s - jnp.sum(q1v * q2v, axis=1, keepdims=True)
    qv = q1v * q2s + q2v * q1s + jnp.cross(q1v, q2v, axis=1)
    return _normalize(jnp.concatenate([qs, qv], axis=1), axis=1)


def _rotate_vec_by_q(t, q):
    qs, qv = q[:, :1], q[:, 1:]
    b = jnp.cross(qv, t, axis=1)
    c = 2.0 * jnp.cross(qv, b, axis=1)
    b = 2.0 * b * qs
    return t + b + c


def _compose_pose_quaternion(p1, p2):
    p1t, p1q = p1[:, :3], p1[:, 3:]
    p2t, p2q = p2[:, :3], p2[:, 3:]
    q = _qmult(p1q, p2q)
    t = p1t + _rotate_vec_by_q(p2t, p1q)
    return jnp.concatenate([t, q], axis=1)


def _invert_pose_quaternion(p):
    t, q = p[:, :3], p[:, 3:]
    q_inv = jnp.concatenate([q[:, :1], -q[:, 1:]], axis=1)
    tinv = -_rotate_vec_by_q(t, q_inv)
    return jnp.concatenate([tinv, q_inv], axis=1)


def _qexp_t(q):
    n = jnp.maximum(jnp.linalg.norm(q, axis=1, keepdims=True), 1e-8)
    return jnp.concatenate([jnp.cos(n), q * jnp.sin(n) / n], axis=1)


def _qlog_t(q):
    n = jnp.maximum(jnp.linalg.norm(q[:, 1:], axis=1, keepdims=True), 1e-8)
    return q[:, 1:] * jnp.arccos(jnp.clip(q[:, :1], -1.0, 1.0)) / n


def _calc_vo_logq(p0, p1):
    q0 = _qexp_t(p0[:, 3:])
    q1 = _qexp_t(p1[:, 3:])
    vos = _compose_pose_quaternion(
        _invert_pose_quaternion(jnp.concatenate([p0[:, :3], q0], axis=1)),
        jnp.concatenate([p1[:, :3], q1], axis=1))
    return jnp.concatenate([vos[:, :3], _qlog_t(vos[:, 3:])], axis=1)


def _calc_vos(poses):  # (1, T, 6) -> (1, T-1, 6)
    p = poses[0]
    pvos = [_calc_vo_logq(p[i][None], p[i + 1][None]) for i in range(p.shape[0] - 1)]
    return jnp.concatenate(pvos, axis=0)[None]


def _calc_vos_simple(poses):  # (1, T, 6) -> (1, T-1, 6)
    p = poses[0]
    pvos = [p[i + 1][None] - p[i][None] for i in range(p.shape[0] - 1)]
    return jnp.concatenate(pvos, axis=0)[None]


# ---------------------------------------------------------------------------
# The criterion
# ---------------------------------------------------------------------------
def _criterion_forward(vo1, poses, Ia, Ia2, Ib, Ib2, srx, srq, w):
    logq = pose2logq(poses)                       # (4, 6): pa1, pa2, pb1, pb2
    pa1_logq, pa2_logq = logq[0:1], logq[1:2]
    pb1_logq, pb2_logq = logq[2:3], logq[3:4]

    vo1_flat = vo1.reshape(-1, 6).astype(jnp.float32)

    # VO from simple differences
    vo2 = _calc_vos_simple(jnp.concatenate([pa1_logq, pb1_logq], axis=0)[None])
    vo_loss_1 = vo_loss(vo2.reshape(-1, 6), vo1_flat, srx, srq)

    # VO from full quaternion composition
    vo3 = _calc_vos(jnp.concatenate([pa2_logq, pb2_logq], axis=0)[None])
    vo_loss_2 = vo_loss(vo3.reshape(-1, 6), vo1_flat, srx, srq)

    # Photometric (NeRF img2mse) losses — single fused Pallas reduction kernel
    photo = photometric_mse_pair(Ia2, Ia, Ib2, Ib)   # = photo_loss_a + photo_loss_b

    return w[0] * vo_loss_1 + w[1] * photo + w[2] * vo_loss_2


_criterion_forward_jit = jax.jit(_criterion_forward)


class AtLocPlusCriterionDFNetPallas:
    def __init__(self, sax=0.0, saq=0.0, srx=0.0, srq=0.0):
        self.sax = jnp.float32(sax)   # unused in forward (kept for parity with the module)
        self.saq = jnp.float32(saq)   # unused in forward (kept for parity with the module)
        self.srx = jnp.float32(srx)
        self.srq = jnp.float32(srq)

    def __call__(self, vo1, pa1, pa2, pb1, pb2,
                 Ia, Ia2, extras_Ia2, Ib, Ib2, extras_Ib2, args):
        poses = jnp.stack(
            [jnp.asarray(p, jnp.float32).reshape(3, 4) for p in (pa1, pa2, pb1, pb2)], axis=0)
        w = jnp.asarray(args.combine_loss_w, jnp.float32)
        # NOTE: images keep their native dtype (bf16 stays bf16 in HBM); the
        # Pallas kernel upcasts per-tile so accumulation is always f32.
        return _criterion_forward_jit(
            jnp.asarray(vo1, jnp.float32), poses,
            jnp.asarray(Ia), jnp.asarray(Ia2), jnp.asarray(Ib), jnp.asarray(Ib2),
            self.srx, self.srq, w)


# ---------------------------------------------------------------------------
# Numpy references (for self-checks only)
# ---------------------------------------------------------------------------
def _mat2quat_np(M):
    Qxx, Qyx, Qzx, Qxy, Qyy, Qzy, Qxz, Qyz, Qzz = np.asarray(M, np.float64).flat
    K = np.array([
        [Qxx - Qyy - Qzz, 0.0, 0.0, 0.0],
        [Qyx + Qxy, Qyy - Qxx - Qzz, 0.0, 0.0],
        [Qzx + Qxz, Qzy + Qyz, Qzz - Qxx - Qyy, 0.0],
        [Qyz - Qzy, Qzx - Qxz, Qxy - Qyx, Qxx + Qyy + Qzz]]) / 3.0
    vals, vecs = np.linalg.eigh(K)
    q = vecs[[3, 0, 1, 2], np.argmax(vals)]
    if q[0] < 0:
        q = -q
    return q


def _pose2logq_np(pose):
    pose = np.asarray(pose, np.float64).reshape(1, 12)
    t = pose[0, [3, 7, 11]]
    R = pose[0].reshape(3, 4)[:3, :3]
    q = _mat2quat_np(R)
    q = q * np.sign(q[0])
    n = np.linalg.norm(q[1:])
    logq = np.zeros(3) if n == 0 else np.arccos(np.clip(q[0], -1.0, 1.0)) * q[1:] / n
    return np.concatenate([t, logq])


def _rand_pose(key):
    ka, kt, kang = jax.random.split(key, 3)
    axis = np.asarray(jax.random.normal(ka, (3,)), np.float64)
    axis = axis / np.linalg.norm(axis)
    ang = float(jax.random.uniform(kang, (), minval=0.3, maxval=1.2))
    K = np.array([[0.0, -axis[2], axis[1]],
                  [axis[2], 0.0, -axis[0]],
                  [-axis[1], axis[0], 0.0]])
    R = np.eye(3) + np.sin(ang) * K + (1.0 - np.cos(ang)) * (K @ K)
    t = np.asarray(jax.random.normal(kt, (3,)), np.float64)
    return np.concatenate([R, t[:, None]], axis=1)[None].astype(np.float32)  # (1, 3, 4)


# ---------------------------------------------------------------------------
# Demo / self-check
# ---------------------------------------------------------------------------
if __name__ == "__main__":
    key = jax.random.PRNGKey(0)
    ks = jax.random.split(key, 18)

    pa1, pa2, pb1, pb2 = (_rand_pose(ks[i]) for i in range(4))

    vo1 = jax.random.normal(ks[4], (1, 1, 6), jnp.float32) * 0.1
    Ia  = jax.random.uniform(ks[5], (2, 3, 16, 16), dtype=jnp.float32)
    Ia2 = jax.random.uniform(ks[6], (2, 3, 16, 16), dtype=jnp.float32)
    Ib  = jax.random.uniform(ks[7], (2, 3, 16, 16), dtype=jnp.float32)
    Ib2 = jax.random.uniform(ks[8], (2, 3, 16, 16), dtype=jnp.float32)

    class Args:
        combine_loss_w = [0.5, 1.0, 0.3]

    crit = AtLocPlusCriterionDFNetPallas(sax=0.0, saq=0.0, srx=0.0, srq=0.0)
    loss = jax.block_until_ready(
        crit(vo1, pa1, pa2, pb1, pb2, Ia, Ia2, {}, Ib, Ib2, {}, Args()))

    # --- check 1: closed-form pose2logq vs float64 numpy Bar-Itzhack reference ---
    logq_jax = np.asarray(pose2logq(jnp.stack(
        [jnp.asarray(p, jnp.float32).reshape(3, 4) for p in (pa1, pa2, pb1, pb2)])))
    logq_ref = np.stack([_pose2logq_np(p) for p in (pa1, pa2, pb1, pb2)])
    np.testing.assert_allclose(logq_jax, logq_ref, atol=1e-3, rtol=1e-3)

    # --- check 2: Pallas photometric MSE vs pure JAX (exact-multiple path) ---
    a = jax.random.normal(ks[9], (2, 3, 16, 16), jnp.float32)
    b = jax.random.normal(ks[10], (2, 3, 16, 16), jnp.float32)
    mse_k = float(jax.block_until_ready(photometric_mse(a, b)))
    mse_r = float(jnp.mean((a - b) ** 2))
    assert abs(mse_k - mse_r) < 1e-4, (mse_k, mse_r)

    # --- check 3: tiny (<128 elems) input exercises the pure-JAX tail path ---
    c = jax.random.normal(ks[11], (3, 5, 7), jnp.float32)   # 105 elements
    d = jax.random.normal(ks[12], (3, 5, 7), jnp.float32)
    mse_k2 = float(jax.block_until_ready(photometric_mse(c, d)))
    mse_r2 = float(jnp.mean((c - d) ** 2))
    assert abs(mse_k2 - mse_r2) < 1e-4, (mse_k2, mse_r2)

    # --- check 4: slab + tail + boundary mask + phantom block under 2-way split ---
    e = jax.random.normal(ks[13], (1, 7500), jnp.float32)   # 58 rows + 76-elem tail
    f = jax.random.normal(ks[14], (1, 7500), jnp.float32)
    mse_k3 = float(jax.block_until_ready(photometric_mse(e, f, block_rows=24)))
    mse_r3 = float(jnp.mean((e - f) ** 2))
    assert abs(mse_k3 - mse_r3) < 1e-4, (mse_k3, mse_r3)

    # --- check 5: multi-block exact-multiple slab under the 2-core split ---
    g = jax.random.normal(ks[15], (4, 128, 128), jnp.float32)   # 512 rows
    h = jax.random.normal(ks[16], (4, 128, 128), jnp.float32)
    mse_k4 = float(jax.block_until_ready(photometric_mse(g, h, block_rows=64)))
    mse_r4 = float(jnp.mean((g - h) ** 2))
    assert abs(mse_k4 - mse_r4) < 1e-4, (mse_k4, mse_r4)

    # --- check 6: fused two-pair kernel == sum of the two MSEs ---
    pair_k = float(jax.block_until_ready(photometric_mse_pair(Ia2, Ia, Ib2, Ib)))
    pair_r = float(jnp.mean((Ia2 - Ia) ** 2) + jnp.mean((Ib2 - Ib) ** 2))
    assert abs(pair_k - pair_r) < 1e-4, (pair_k, pair_r)

    # --- check 7: full loss vs all-JAX reference (Pallas photometric replaced by jnp) ---
    lq = jnp.asarray(logq_jax, jnp.float32)
    vo2_r = _calc_vos_simple(jnp.concatenate([lq[0:1], lq[2:3]], axis=0)[None])
    vo3_r = _calc_vos(jnp.concatenate([lq[1:2], lq[3:4]], axis=0)[None])
    vl1_r = vo_loss(vo2_r.reshape(-1, 6), vo1.reshape(-1, 6), 0.0, 0.0)
    vl2_r = vo_loss(vo3_r.reshape(-1, 6), vo1.reshape(-1, 6), 0.0, 0.0)
    w = Args.combine_loss_w
    loss_ref = float(w[0] * vl1_r + w[1] * pair_r + w[2] * vl2_r)
    assert np.isfinite(float(loss))
    np.testing.assert_allclose(float(loss), loss_ref, rtol=1e-4, atol=1e-4)

    print("KERNEL_OK")
</pallas_src>

<mosaic_0001>
module attributes {stable_mosaic.version = 11 : i64} {
  func.func @_photo_sq_sum_kernel(%arg0: i32, %arg1: i32, %arg2: memref<16x128xf32, #tpu.memory_space<vmem>>, %arg3: memref<16x128xf32, #tpu.memory_space<vmem>>, %arg4: memref<16x128xf32, #tpu.memory_space<vmem>>, %arg5: memref<16x128xf32, #tpu.memory_space<vmem>>, %arg6: memref<1x1x1xf32, #tpu.memory_space<vmem>>, %arg7: memref<8x128xf32, #tpu.memory_space<vmem>>) attributes {dimension_semantics = [#tpu.dimension_semantics<parallel>, #tpu.dimension_semantics<arbitrary>], iteration_bounds = array<i64: 1, 1>, scalar_prefetch = 0 : i64, scratch_operands = 1 : i64, tpu.core_type = #tpu.core_type<tc>, window_params = [{transform_indices = @transform_0, window_bounds = array<i64: 16, 128>}, {transform_indices = @transform_1, window_bounds = array<i64: 16, 128>}, {transform_indices = @transform_2, window_bounds = array<i64: 16, 128>}, {transform_indices = @transform_3, window_bounds = array<i64: 16, 128>}, {transform_indices = @transform_4, window_bounds = array<i64: 1, 1, 1>}]} {
    %c0_i32 = arith.constant 0 : i32
    %0 = arith.cmpi eq, %arg1, %c0_i32 : i32
    %1 = arith.extui %0 : i1 to i32
    %c0_i32_0 = arith.constant 0 : i32
    %2 = arith.cmpi ne, %1, %c0_i32_0 : i32
    scf.if %2 {
      %cst = arith.constant 0.000000e+00 : f32
      %17 = vector.broadcast %cst : f32 to vector<8x128xf32>
      %c0 = arith.constant 0 : index
      %c0_8 = arith.constant 0 : index
      %18 = vector.load %arg7[%c0, %c0_8] : memref<8x128xf32, #tpu.memory_space<vmem>>, vector<8x128xf32>
      tpu.vector_store %arg7[%c0, %c0_8], %17 {strides = array<i32>} : memref<8x128xf32, #tpu.memory_space<vmem>>, vector<8x128xf32>,
    } else {
    }
    %c1_i32 = arith.constant 1 : i32
    %3 = arith.muli %arg0, %c1_i32 : i32
    %4 = arith.addi %3, %arg1 : i32
    %c16_i32 = arith.constant 16 : i32
    %5 = arith.muli %4, %c16_i32 : i32
    %c16_i32_1 = arith.constant 16 : i32
    %6 = arith.addi %5, %c16_i32_1 : i32
    %c12_i32 = arith.constant 12 : i32
    %7 = arith.cmpi sle, %6, %c12_i32 : i32
    %8 = arith.extui %7 : i1 to i32
    %c0_i32_2 = arith.constant 0 : i32
    %9 = arith.cmpi ne, %8, %c0_i32_2 : i32
    scf.if %9 {
      %c0 = arith.constant 0 : index
      %c0_8 = arith.constant 0 : index
      %17 = vector.load %arg7[%c0, %c0_8] : memref<8x128xf32, #tpu.memory_space<vmem>>, vector<8x128xf32>
      %cst = arith.constant 0.000000e+00 : f32
      %18 = vector.broadcast %cst : f32 to vector<8x128xf32>
      %c0_9 = arith.constant 0 : index
      %c0_10 = arith.constant 0 : index
      %19 = vector.load %arg2[%c0_9, %c0_10] : memref<16x128xf32, #tpu.memory_space<vmem>>, vector<16x128xf32>
      %c0_11 = arith.constant 0 : index
      %c0_12 = arith.constant 0 : index
      %20 = vector.load %arg3[%c0_11, %c0_12] : memref<16x128xf32, #tpu.memory_space<vmem>>, vector<16x128xf32>
      %21 = arith.subf %19, %20 : vector<16x128xf32>
      %22 = arith.mulf %21, %21 : vector<16x128xf32>
      %23 = vector.shape_cast %22 : vector<16x128xf32> to vector<2x8x128xf32>
      %cst_13 = arith.constant dense<0.000000e+00> : vector<8x128xf32>
      %24 = vector.multi_reduction <add>, %23, %cst_13 [0] : vector<2x8x128xf32> to vector<8x128xf32>
      %25 = arith.addf %18, %24 : vector<8x128xf32>
      %c0_14 = arith.constant 0 : index
      %c0_15 = arith.constant 0 : index
      %26 = vector.load %arg4[%c0_14, %c0_15] : memref<16x128xf32, #tpu.memory_space<vmem>>, vector<16x128xf32>
      %c0_16 = arith.constant 0 : index
      %c0_17 = arith.constant 0 : index
      %27 = vector.load %arg5[%c0_16, %c0_17] : memref<16x128xf32, #tpu.memory_space<vmem>>, vector<16x128xf32>
      %28 = arith.subf %26, %27 : vector<16x128xf32>
      %29 = arith.mulf %28, %28 : vector<16x128xf32>
      %30 = vector.shape_cast %29 : vector<16x128xf32> to vector<2x8x128xf32>
      %cst_18 = arith.constant dense<0.000000e+00> : vector<8x128xf32>
      %31 = vector.multi_reduction <add>, %30, %cst_18 [0] : vector<2x8x128xf32> to vector<8x128xf32>
      %32 = arith.addf %25, %31 : vector<8x128xf32>
      %33 = arith.addf %17, %32 : vector<8x128xf32>
      %c0_19 = arith.constant 0 : index
      %c0_20 = arith.constant 0 : index
      %34 = vector.load %arg7[%c0_19, %c0_20] : memref<8x128xf32, #tpu.memory_space<vmem>>, vector<8x128xf32>
      tpu.vector_store %arg7[%c0_19, %c0_20], %33 {strides = array<i32>} : memref<8x128xf32, #tpu.memory_space<vmem>>, vector<8x128xf32>,
    } else {
    }
    %c16_i32_3 = arith.constant 16 : i32
    %10 = arith.addi %5, %c16_i32_3 : i32
    %c12_i32_4 = arith.constant 12 : i32
    %11 = arith.cmpi sgt, %10, %c12_i32_4 : i32
    %12 = arith.extui %11 : i1 to i32
    %c0_i32_5 = arith.constant 0 : i32
    %13 = arith.cmpi ne, %12, %c0_i32_5 : i32
    scf.if %13 {
      %c0 = arith.constant 0 : index
      %c0_8 = arith.constant 0 : index
      %17 = vector.load %arg7[%c0, %c0_8] : memref<8x128xf32, #tpu.memory_space<vmem>>, vector<8x128xf32>
      %18 = tpu.iota {dimensions = array<i32: 0>} : vector<16x128xi32>
      %19 = vector.broadcast %5 : i32 to vector<16x128xi32>
      %20 = arith.addi %19, %18 : vector<16x128xi32>
      %c12_i32_9 = arith.constant 12 : i32
      %21 = vector.broadcast %c12_i32_9 : i32 to vector<16x128xi32>
      %22 = arith.cmpi slt, %20, %21 : vector<16x128xi32>
      %cst = arith.constant 0.000000e+00 : f32
      %23 = vector.broadcast %cst : f32 to vector<8x128xf32>
      %c0_10 = arith.constant 0 : index
      %c0_11 = arith.constant 0 : index
      %24 = vector.load %arg2[%c0_10, %c0_11] : memref<16x128xf32, #tpu.memory_space<vmem>>, vector<16x128xf32>
      %c0_12 = arith.constant 0 : index
      %c0_13 = arith.constant 0 : index
      %25 = vector.load %arg3[%c0_12, %c0_13] : memref<16x128xf32, #tpu.memory_space<vmem>>, vector<16x128xf32>
      %26 = arith.subf %24, %25 : vector<16x128xf32>
      %27 = arith.mulf %26, %26 : vector<16x128xf32>
      %cst_14 = arith.constant 0.000000e+00 : f32
      %28 = vector.broadcast %cst_14 : f32 to vector<16x128xf32>
      %29 = arith.select %22, %27, %28 : vector<16x128xi1>, vector<16x128xf32>
      %30 = vector.shape_cast %29 : vector<16x128xf32> to vector<2x8x128xf32>
      %cst_15 = arith.constant dense<0.000000e+00> : vector<8x128xf32>
      %31 = vector.multi_reduction <add>, %30, %cst_15 [0] : vector<2x8x128xf32> to vector<8x128xf32>
      %32 = arith.addf %23, %31 : vector<8x128xf32>
      %c0_16 = arith.constant 0 : index
      %c0_17 = arith.constant 0 : index
      %33 = vector.load %arg4[%c0_16, %c0_17] : memref<16x128xf32, #tpu.memory_space<vmem>>, vector<16x128xf32>
      %c0_18 = arith.constant 0 : index
      %c0_19 = arith.constant 0 : index
      %34 = vector.load %arg5[%c0_18, %c0_19] : memref<16x128xf32, #tpu.memory_space<vmem>>, vector<16x128xf32>
      %35 = arith.subf %33, %34 : vector<16x128xf32>
      %36 = arith.mulf %35, %35 : vector<16x128xf32>
      %cst_20 = arith.constant 0.000000e+00 : f32
      %37 = vector.broadcast %cst_20 : f32 to vector<16x128xf32>
      %38 = arith.select %22, %36, %37 : vector<16x128xi1>, vector<16x128xf32>
      %39 = vector.shape_cast %38 : vector<16x128xf32> to vector<2x8x128xf32>
      %cst_21 = arith.constant dense<0.000000e+00> : vector<8x128xf32>
      %40 = vector.multi_reduction <add>, %39, %cst_21 [0] : vector<2x8x128xf32> to vector<8x128xf32>
      %41 = arith.addf %32, %40 : vector<8x128xf32>
      %42 = arith.addf %17, %41 : vector<8x128xf32>
      %c0_22 = arith.constant 0 : index
      %c0_23 = arith.constant 0 : index
      %43 = vector.load %arg7[%c0_22, %c0_23] : memref<8x128xf32, #tpu.memory_space<vmem>>, vector<8x128xf32>
      tpu.vector_store %arg7[%c0_22, %c0_23], %42 {strides = array<i32>} : memref<8x128xf32, #tpu.memory_space<vmem>>, vector<8x128xf32>,
    } else {
    }
    %c0_i32_6 = arith.constant 0 : i32
    %14 = arith.cmpi eq, %arg1, %c0_i32_6 : i32
    %15 = arith.extui %14 : i1 to i32
    %c0_i32_7 = arith.constant 0 : i32
    %16 = arith.cmpi ne, %15, %c0_i32_7 : i32
    scf.if %16 {
      %c0 = arith.constant 0 : index
      %c0_8 = arith.constant 0 : index
      %17 = vector.load %arg7[%c0, %c0_8] : memref<8x128xf32, #tpu.memory_space<vmem>>, vector<8x128xf32>
      %18 = vector.shape_cast %17 : vector<8x128xf32> to vector<1x8x128xf32>
      %cst = arith.constant dense<0.000000e+00> : vector<1xf32>
      %19 = vector.multi_reduction <add>, %18, %cst [1, 2] : vector<1x8x128xf32> to vector<1xf32>
      %20 = vector.shape_cast %19 : vector<1xf32> to vector<1x1x1xf32>
      %21 = vector.extract %20[0, 0, 0] : f32 from vector<1x1x1xf32>
      %22 = vector.broadcast %21 : f32 to vector<1x1x1xf32>
      %c0_9 = arith.constant 0 : index
      %c0_10 = arith.constant 0 : index
      %c0_11 = arith.constant 0 : index
      %23 = vector.load %arg6[%c0_9, %c0_10, %c0_11] : memref<1x1x1xf32, #tpu.memory_space<vmem>>, vector<1x1x1xf32>
      tpu.vector_store %arg6[%c0_9, %c0_10, %c0_11], %22 {strides = array<i32>} : memref<1x1x1xf32, #tpu.memory_space<vmem>>, vector<1x1x1xf32>,
    } else {
    }
    return
  }
  func.func @transform_0(%arg0: i32, %arg1: i32) -> (i32, i32) {
    %c1_i32 = arith.constant 1 : i32
    %0 = arith.muli %arg0, %c1_i32 : i32
    %1 = arith.addi %0, %arg1 : i32
    %c0_i32 = arith.constant 0 : i32
    %2 = arith.minsi %1, %c0_i32 : i32
    %c0_i32_0 = arith.constant 0 : i32
    %c0_i32_1 = arith.constant 0 : i32
    return %2, %c0_i32_0 : i32, i32
  }
  func.func @transform_1(%arg0: i32, %arg1: i32) -> (i32, i32) {
    %c1_i32 = arith.constant 1 : i32
    %0 = arith.muli %arg0, %c1_i32 : i32
    %1 = arith.addi %0, %arg1 : i32
    %c0_i32 = arith.constant 0 : i32
    %2 = arith.minsi %1, %c0_i32 : i32
    %c0_i32_0 = arith.constant 0 : i32
    %c0_i32_1 = arith.constant 0 : i32
    return %2, %c0_i32_0 : i32, i32
  }
  func.func @transform_2(%arg0: i32, %arg1: i32) -> (i32, i32) {
    %c1_i32 = arith.constant 1 : i32
    %0 = arith.muli %arg0, %c1_i32 : i32
    %1 = arith.addi %0, %arg1 : i32
    %c0_i32 = arith.constant 0 : i32
    %2 = arith.minsi %1, %c0_i32 : i32
    %c0_i32_0 = arith.constant 0 : i32
    %c0_i32_1 = arith.constant 0 : i32
    return %2, %c0_i32_0 : i32, i32
  }
  func.func @transform_3(%arg0: i32, %arg1: i32) -> (i32, i32) {
    %c1_i32 = arith.constant 1 : i32
    %0 = arith.muli %arg0, %c1_i32 : i32
    %1 = arith.addi %0, %arg1 : i32
    %c0_i32 = arith.constant 0 : i32
    %2 = arith.minsi %1, %c0_i32 : i32
    %c0_i32_0 = arith.constant 0 : i32
    %c0_i32_1 = arith.constant 0 : i32
    return %2, %c0_i32_0 : i32, i32
  }
  func.func @transform_4(%arg0: i32, %arg1: i32) -> (i32, i32, i32) {
    %c0_i32 = arith.constant 0 : i32
    %c0_i32_0 = arith.constant 0 : i32
    %c0_i32_1 = arith.constant 0 : i32
    return %arg0, %c0_i32, %c0_i32_0 : i32, i32, i32
  }
}

</mosaic_0001>

<llo_original>
// kernel: _criterion_forward.1
$region0: #{_criterion_forward.1}
  #allocation0 [shape = 'u32[]', space=smem, size = 0x4, offset = 0x4, fixed_abs, tag = 'smem constant byte address 0x4 - core index']
  #allocation1 [shape = 'u32[144,128]{1,0:T(1,128)}', space=vmem, size = 0x12000, scoped, tag = 'internal scratch']
  #allocation2 [shape = 'f32[8,128]{1,0:T(8,128)}', space=vmem, size = 0x1000, scoped, tag = 'scratch operand']
  %s0 = inlined_call_operand.vmem [shape: f32[12,128], index: 0, kind: input, shape index: {}]
  %s1 = inlined_call_operand.vmem [shape: f32[12,128], index: 1, kind: input, shape index: {}]
  %s2 = inlined_call_operand.vmem [shape: f32[12,128], index: 2, kind: input, shape index: {}]
  %s3 = inlined_call_operand.vmem [shape: f32[12,128], index: 3, kind: input, shape index: {}]
  %s4 = inlined_call_operand.hbm [shape: f32[1,1,1], index: 4, kind: output, shape index: {}]
  %s5 = sld [smem:[#allocation0]]
  $region42: #{_criterion_forward.1} parent=0
    _
  %s7 = ssub.s32 1, %s5
  %s8 = scalar_select 0, %s7, %s5
  $region1: #{_criterion_forward.1} parent=0
    #allocation3 [shape = 'u8[512]{0}', space=vmem, size = 0x400, scoped, tag = 'output window, operand 0, single buffered']
    #allocation4 [shape = 's32[1]{0}', space=sflag, size = 0x4, scoped, tag = 'scoped memory for _criterion_forward.1']
    %9 = vsyncpa [#allocation4], 0
    // Predicated region
    $region2: #{_criterion_forward.1} parent=1 // pred_check
      _
    $region3: #{_criterion_forward.1} parent=1 // pred_check_branch
      %11 = sbr.rel (0) target = $region5
    $region4: #{_criterion_forward.1} parent=1 // pred_region
      %s12 = sadd.s32 0, 0
      %p13 = scmp.lt.s32.totalorder %s12, 0
      %s14 = scalar_select %p13, %s12, 0
      %s15 = smul.u32 2, %s14
      %p16 = scmp.lt.s32.totalorder %s15, 1
      %s17 = scalar_select %p16, %s15, 1
      %s18 = smul.addr %s17, 8
      %s19 = scalar_lea.vmem %s0, %s18
      %s20 = sadd.s32 0, 0
      %p21 = scmp.lt.s32.totalorder %s20, 0
      %s22 = scalar_select %p21, %s20, 0
      %s23 = smul.u32 2, %s22
    $region5: #{_criterion_forward.1} parent=1 // pred_fallthru
      _
    // Predicated region
    $region6: #{_criterion_forward.1} parent=1 // pred_check
      _
    $region7: #{_criterion_forward.1} parent=1 // pred_check_branch
      %25 = sbr.rel (0) target = $region9
    $region8: #{_criterion_forward.1} parent=1 // pred_region
      %s26 = sadd.s32 0, 0
      %p27 = scmp.lt.s32.totalorder %s26, 0
      %s28 = scalar_select %p27, %s26, 0
      %s29 = smul.u32 2, %s28
      %p30 = scmp.lt.s32.totalorder %s29, 1
      %s31 = scalar_select %p30, %s29, 1
      %s32 = smul.addr %s31, 8
      %s33 = scalar_lea.vmem %s1, %s32
      %s34 = sadd.s32 0, 0
      %p35 = scmp.lt.s32.totalorder %s34, 0
      %s36 = scalar_select %p35, %s34, 0
      %s37 = smul.u32 2, %s36
    $region9: #{_criterion_forward.1} parent=1 // pred_fallthru
      _
    // Predicated region
    $region10: #{_criterion_forward.1} parent=1 // pred_check
      _
    $region11: #{_criterion_forward.1} parent=1 // pred_check_branch
      %39 = sbr.rel (0) target = $region13
    $region12: #{_criterion_forward.1} parent=1 // pred_region
      %s40 = sadd.s32 0, 0
      %p41 = scmp.lt.s32.totalorder %s40, 0
      %s42 = scalar_select %p41, %s40, 0
      %s43 = smul.u32 2, %s42
      %p44 = scmp.lt.s32.totalorder %s43, 1
      %s45 = scalar_select %p44, %s43, 1
      %s46 = smul.addr %s45, 8
      %s47 = scalar_lea.vmem %s2, %s46
      %s48 = sadd.s32 0, 0
      %p49 = scmp.lt.s32.totalorder %s48, 0
      %s50 = scalar_select %p49, %s48, 0
      %s51 = smul.u32 2, %s50
    $region13: #{_criterion_forward.1} parent=1 // pred_fallthru
      _
    // Predicated region
    $region14: #{_criterion_forward.1} parent=1 // pred_check
      _
    $region15: #{_criterion_forward.1} parent=1 // pred_check_branch
      %53 = sbr.rel (0) target = $region17
    $region16: #{_criterion_forward.1} parent=1 // pred_region
      %s54 = sadd.s32 0, 0
      %p55 = scmp.lt.s32.totalorder %s54, 0
      %s56 = scalar_select %p55, %s54, 0
      %s57 = smul.u32 2, %s56
      %p58 = scmp.lt.s32.totalorder %s57, 1
      %s59 = scalar_select %p58, %s57, 1
      %s60 = smul.addr %s59, 8
      %s61 = scalar_lea.vmem %s3, %s60
      %s62 = sadd.s32 0, 0
      %p63 = scmp.lt.s32.totalorder %s62, 0
      %s64 = scalar_select %p63, %s62, 0
      %s65 = smul.u32 2, %s64
    $region17: #{_criterion_forward.1} parent=1 // pred_fallthru
      _
    %s66 = sadd.s32 0, 0
    %p67 = scmp.lt.s32.totalorder %s66, 0
    %s68 = scalar_select %p67, %s66, 0
    %s69 = smul.u32 2, %s68
    %p70 = scmp.lt.s32.totalorder %s69, 1
    %s71 = scalar_select %p70, %s69, 1
    %s72 = smul.addr %s71, 8
    %s73 = scalar_lea.vmem %s0, %s72
    %s74 = sadd.s32 0, 0
    %p75 = scmp.lt.s32.totalorder %s74, 0
    %s76 = scalar_select %p75, %s74, 0
    %s77 = smul.u32 2, %s76
    %p78 = scmp.lt.s32.totalorder %s77, 1
    %s79 = scalar_select %p78, %s77, 1
    %s80 = smul.addr %s79, 8
    %s81 = scalar_lea.vmem %s1, %s80
    %s82 = sadd.s32 0, 0
    %p83 = scmp.lt.s32.totalorder %s82, 0
    %s84 = scalar_select %p83, %s82, 0
    %s85 = smul.u32 2, %s84
    %p86 = scmp.lt.s32.totalorder %s85, 1
    %s87 = scalar_select %p86, %s85, 1
    %s88 = smul.addr %s87, 8
    %s89 = scalar_lea.vmem %s2, %s88
    %s90 = sadd.s32 0, 0
    %p91 = scmp.lt.s32.totalorder %s90, 0
    %s92 = scalar_select %p91, %s90, 0
    %s93 = smul.u32 2, %s92
    %p94 = scmp.lt.s32.totalorder %s93, 1
    %s95 = scalar_select %p94, %s93, 1
    %s96 = smul.addr %s95, 8
    %s97 = scalar_lea.vmem %s3, %s96
    %s98 = sadd.s32 0, 0
    %p99 = scmp.lt.s32.totalorder %s98, 0
    %s100 = scalar_select %p99, %s98, 0
    %s101 = smul.u32 2, %s100
    %p102 = scmp.lt.s32.totalorder %s101, 1
    %s103 = scalar_select %p102, %s101, 1
    %s104 = smul.addr %s103, 8
    %s105 = scalar_lea.vmem %s0, %s104
    %s106 = sadd.s32 0, 0
    %p107 = scmp.lt.s32.totalorder %s106, 0
    %s108 = scalar_select %p107, %s106, 0
    %s109 = smul.u32 2, %s108
    %s110 = sadd.s32 0, 0
    %p111 = scmp.lt.s32.totalorder %s110, 0
    %s112 = scalar_select %p111, %s110, 0
    %s113 = smul.u32 2, %s112
    %p114 = scmp.lt.s32.totalorder %s113, 1
    %s115 = scalar_select %p114, %s113, 1
    %s116 = smul.addr %s115, 8
    %s117 = scalar_lea.vmem %s1, %s116
    %s118 = sadd.s32 0, 0
    %p119 = scmp.lt.s32.totalorder %s118, 0
    %s120 = scalar_select %p119, %s118, 0
    %s121 = smul.u32 2, %s120
    %s122 = sadd.s32 0, 0
    %p123 = scmp.lt.s32.totalorder %s122, 0
    %s124 = scalar_select %p123, %s122, 0
    %s125 = smul.u32 2, %s124
    %p126 = scmp.lt.s32.totalorder %s125, 1
    %s127 = scalar_select %p126, %s125, 1
    %s128 = smul.addr %s127, 8
    %s129 = scalar_lea.vmem %s2, %s128
    %s130 = sadd.s32 0, 0
    %p131 = scmp.lt.s32.totalorder %s130, 0
    %s132 = scalar_select %p131, %s130, 0
    %s133 = smul.u32 2, %s132
    %s134 = sadd.s32 0, 0
    %p135 = scmp.lt.s32.totalorder %s134, 0
    %s136 = scalar_select %p135, %s134, 0
    %s137 = smul.u32 2, %s136
    %p138 = scmp.lt.s32.totalorder %s137, 1
    %s139 = scalar_select %p138, %s137, 1
    %s140 = smul.addr %s139, 8
    %s141 = scalar_lea.vmem %s3, %s140
    %s142 = sadd.s32 0, 0
    %p143 = scmp.lt.s32.totalorder %s142, 0
    %s144 = scalar_select %p143, %s142, 0
    %s145 = smul.u32 2, %s144
    %p146 = scmp.eq.s32.totalorder 0, 0
    // Predicated region
    $region18: #{_criterion_forward.1} parent=1 // pred_check
      %p147 = pneg %p146
    $region19: #{_criterion_forward.1} parent=1 // pred_check_branch
      %149 = sbr.rel (%p147) target = $region21
    $region20: #{_criterion_forward.1} parent=1 // pred_region
      %150 = vst [vmem:[#allocation2] sm:$0xff] 0.0
    $region21: #{_criterion_forward.1} parent=1 // pred_fallthru
      _
    %s151 = sadd.s32 0, 0
    %s152 = smul.u32 %s151, 16
    %s153 = sadd.s32 %s152, 16
    %p154 = scmp.le.s32.totalorder %s153, 12
    // Predicated region
    $region22: #{_criterion_forward.1} parent=1 // pred_check
      %p155 = pneg %p154
    $region23: #{_criterion_forward.1} parent=1 // pred_check_branch
      %157 = sbr.rel (%p155) target = $region25
    $region24: #{_criterion_forward.1} parent=1 // pred_region
      %v158 = vld [vmem:[#allocation2] sm:$0xff]
      %v159 = vld [vmem:[%s105] sm:$0xff]
      %v160 = vld [vmem:[%s105 + $0x8] sm:$0xff]
      %v161 = vld [vmem:[%s117] sm:$0xff]
      %v162 = vld [vmem:[%s117 + $0x8] sm:$0xff]
      %v163 = vsub.f32 %v159, %v161
      %v164 = vsub.f32 %v160, %v162
      %v165 = vmul.f32 %v163, %v163
      %v166 = vmul.f32 %v164, %v164
      %v167 = vadd.f32 %v165, %v166
      %v168 = vadd.f32 %v167, 0.0
      %v169 = vld [vmem:[%s129] sm:$0xff]
      %v170 = vld [vmem:[%s129 + $0x8] sm:$0xff]
      %v171 = vld [vmem:[%s141] sm:$0xff]
      %v172 = vld [vmem:[%s141 + $0x8] sm:$0xff]
      %v173 = vsub.f32 %v169, %v171
      %v174 = vsub.f32 %v170, %v172
      %v175 = vmul.f32 %v173, %v173
      %v176 = vmul.f32 %v174, %v174
      %v177 = vadd.f32 %v175, %v176
      %v178 = vadd.f32 %v168, %v177
      %v179 = vadd.f32 %v158, %v178
      %180 = vst [vmem:[#allocation2] sm:$0xff] %v179
    $region25: #{_criterion_forward.1} parent=1 // pred_fallthru
      _
    %p181 = scmp.gt.s32.totalorder %s153, 12
    // Predicated region
    $region26: #{_criterion_forward.1} parent=1 // pred_check
      %p182 = pneg %p181
    $region27: #{_criterion_forward.1} parent=1 // pred_check_branch
      %184 = sbr.rel (%p182) target = $region29
    $region28: #{_criterion_forward.1} parent=1 // pred_region
      %v185 = vld [vmem:[#allocation2] sm:$0xff]
      %v186 = vlaneseq
      %v187 = vshrl.u32 %v186, 7
      %v188 = vadd.s32 %v187, 8
      %v189 = vstv %s152
      %v190 = vadd.s32 %v189, %v187
      %v191 = vadd.s32 %v189, %v188
      %vm192 = vcmp.lt.s32.totalorder %v190, 12
      %vm193 = vcmp.lt.s32.totalorder %v191, 12
      %v194 = vld [vmem:[%s105] sm:$0xff]
      %v195 = vld [vmem:[%s105 + $0x8] sm:$0xff]
      %v196 = vld [vmem:[%s117] sm:$0xff]
      %v197 = vld [vmem:[%s117 + $0x8] sm:$0xff]
      %v198 = vsub.f32 %v194, %v196
      %v199 = vsub.f32 %v195, %v197
      %v200 = vmul.f32 %v198, %v198
      %v201 = vmul.f32 %v199, %v199
      %v202 = vsel %vm192, %v200, 0.0
      %v203 = vsel %vm193, %v201, 0.0
      %v204 = vadd.f32 %v202, %v203
      %v205 = vadd.f32 %v204, 0.0
      %v206 = vld [vmem:[%s129] sm:$0xff]
      %v207 = vld [vmem:[%s129 + $0x8] sm:$0xff]
      %v208 = vld [vmem:[%s141] sm:$0xff]
      %v209 = vld [vmem:[%s141 + $0x8] sm:$0xff]
      %v210 = vsub.f32 %v206, %v208
      %v211 = vsub.f32 %v207, %v209
      %v212 = vmul.f32 %v210, %v210
      %v213 = vmul.f32 %v211, %v211
      %v214 = vsel %vm192, %v212, 0.0
      %v215 = vsel %vm193, %v213, 0.0
      %v216 = vadd.f32 %v214, %v215
      %v217 = vadd.f32 %v205, %v216
      %v218 = vadd.f32 %v185, %v217
      %219 = vst [vmem:[#allocation2] sm:$0xff] %v218
    $region29: #{_criterion_forward.1} parent=1 // pred_fallthru
      _
    // Predicated region
    $region30: #{_criterion_forward.1} parent=1 // pred_check
      %p220 = pneg %p146
    $region31: #{_criterion_forward.1} parent=1 // pred_check_branch
      %222 = sbr.rel (%p220) target = $region33
    $region32: #{_criterion_forward.1} parent=1 // pred_region
      %v223 = vld [vmem:[#allocation2] sm:$0xff]
      %224 = vadd.xlane.f32.xlu0 %v223
      %v225 = vpop.xlane.xlu0 %224
      %v226 = vrot.slane %v225, 4
      %v227 = vadd.f32 %v225, %v226
      %v228 = vrot.slane %v227, 2
      %v229 = vadd.f32 %v227, %v228
      %v230 = vrot.slane %v229, 1
      %v231 = vadd.f32 %v229, %v230
      %s232 = vtos %v231
      %v233 = vstv %s232
      %vm234 = vcmask 0
      %235 = vst.msk [vmem:[#allocation3] sm:$0x1] %vm234, %v233
    $region33: #{_criterion_forward.1} parent=1 // pred_fallthru
      _
    // Predicated region
    $region34: #{_criterion_forward.1} parent=1 // pred_check
      _
    $region35: #{_criterion_forward.1} parent=1 // pred_check_branch
      %237 = sbr.rel (0) target = $region37
    $region36: #{_criterion_forward.1} parent=1 // pred_region
      %s239 = ssub.s32 16, 16
      %240 = vsyncadd [#allocation4], %s239
      %s242 = sshll.u32 [#allocation3], 4
      %s243 = int_to_ptr.vmem [resolvable:$true] %s242
      %245 = dma.vmem_to_hbm [thread:$0]  %s243, 16, %s4, [#allocation4]
    $region37: #{_criterion_forward.1} parent=1 // pred_fallthru
      _
    // Predicated region
    $region38: #{_criterion_forward.1} parent=1 // pred_check
      _
    $region39: #{_criterion_forward.1} parent=1 // pred_check_branch
      %247 = sbr.rel (0) target = $region41
    $region40: #{_criterion_forward.1} parent=1 // pred_region
      %248 = dma.done [#allocation4], 16
    $region41: #{_criterion_forward.1} parent=1 // pred_fallthru
      _
    %249 = vsyncpa [#allocation4], 1

</llo_original>
